<compile_context>
chip_gen: v6e
topology: v6e:2x2x1
jax: 0.10.0
libtpu: 0.0.40
codegen_flags: <defaults>
</compile_context>

<pallas_src>
import math

import jax
import jax.numpy as jnp
from jax.experimental import pallas as pl
from jax.experimental.pallas import tpu as pltpu


def _round_up(x, n):
    return (x + n - 1) // n * n


def _div_add_mul_kernel(x_ref, m_ref, w_ref, o_ref):
    # x_ref, m_ref, o_ref: (TM, D) f32 tiles of the flattened GEMM.
    # w_ref: (D, D) f32, resident across all grid steps.
    # (x / 0.1 + m) * 2  ==  20*x + 2*m   (fold divides; reuse 2*m twice)
    m2 = m_ref[...] * 2.0
    out3 = x_ref[...] * 20.0 + m2
    out5 = jnp.dot(out3, w_ref[...], preferred_element_type=jnp.float32)
    o_ref[...] = out5 * 20.0 + m2


def _choose_tm(m_rows, d, max_tm=2048, vmem_budget_bytes=12 * 1024 * 1024):
    """Largest M-tile (multiple of 8, <= max_tm) whose double-buffered
    x/m/out tiles plus the resident (double-buffered) W stay within a budget
    that fits the default scoped-VMEM limit on every TPU generation
    (v5e 16 MiB, v6e/v7x 32 MiB)."""
    w_bytes = 2 * d * d * 4          # W (Pallas double-buffers it by default)
    per_row = 3 * 2 * d * 4          # x, m, out tiles, double-buffered, f32
    tm = (vmem_budget_bytes - w_bytes) // per_row
    tm = max(8, min(max_tm, tm))
    tm = max(8, (tm // 8) * 8)
    tm = min(tm, _round_up(m_rows, 8))
    return tm


@jax.jit
def div_add_mul(inputs, mask, W):
    """inputs, mask: (..., S, D) float32; W: (S, D) float32 with S == D."""
    assert mask.shape == inputs.shape
    S, D = inputs.shape[-2], inputs.shape[-1]
    # matmul (..., S, D) @ W and the second "+ mask" both require square W.
    assert W.shape == (S, D) and S == D, "DivAddMul needs square last two dims"

    M = math.prod(inputs.shape[:-1])
    x_flat = inputs.reshape(M, D)
    m_flat = mask.reshape(M, D)

    tm = _choose_tm(M, D)

    # Pad rows only to the sublane multiple (8); a ragged last grid block is
    # fine because rows are independent (over-read rows are never written).
    M_pad = _round_up(M, 8)
    if M_pad != M:
        pad = ((0, M_pad - M), (0, 0))
        x_flat = jnp.pad(x_flat, pad)
        m_flat = jnp.pad(m_flat, pad)

    out = pl.pallas_call(
        _div_add_mul_kernel,
        out_shape=jax.ShapeDtypeStruct((M_pad, D), jnp.float32),
        grid_spec=pltpu.PrefetchScalarGridSpec(
            num_scalar_prefetch=0,
            grid=(pl.cdiv(M_pad, tm),),
            in_specs=[
                pl.BlockSpec((tm, D), lambda i: (i, 0)),
                pl.BlockSpec((tm, D), lambda i: (i, 0)),
                # Constant index_map: W is DMA'd into VMEM once and reused by
                # every grid step.
                pl.BlockSpec((D, D), lambda i: (0, 0)),
            ],
            out_specs=pl.BlockSpec((tm, D), lambda i: (i, 0)),
        ),
        compiler_params=pltpu.CompilerParams(
            # Rows of the flattened GEMM are independent: shard across both
            # TensorCores on v7x; neutral on single-TC v5e/v6e.
            dimension_semantics=("parallel",),
        ),
    )(x_flat, m_flat, W)

    if M_pad != M:
        out = out[:M]
    return out.reshape(inputs.shape)


def reference(inputs, mask, W):
    out3 = (inputs / 0.1 + mask) * 2.0
    out5 = jnp.matmul(out3, W)
    return (out5 / 0.1 + mask) * 2.0


def _check(dims, key):
    # Module semantics: example inputs = (ones(dims), randn(dims)); W = ones(dims[-2:]).
    inputs = jnp.ones(dims, dtype=jnp.float32)
    mask = jax.random.normal(key, dims, dtype=jnp.float32)
    W = jnp.ones(dims[-2:], dtype=jnp.float32)

    out = jax.block_until_ready(div_add_mul(inputs, mask, W))
    ref = reference(inputs, mask, W)

    assert out.shape == dims and out.dtype == jnp.float32
    assert jnp.allclose(out, ref, rtol=1e-5, atol=1e-5), f"mismatch vs reference at {dims}"


if __name__ == "__main__":
    key = jax.random.PRNGKey(0)
    k1, k2 = jax.random.split(key)

    # Small spec-faithful shape (B, H, S, S): flattened GEMM (128, 16) @ (16, 16).
    _check((2, 4, 16, 16), k1)
    # MXU / lane-aligned shape: flattened GEMM (1024, 128) @ (128, 128),
    # single grid step, lane-dense unmasked stores.
    _check((2, 4, 128, 128), k2)

    print("KERNEL_OK")
</pallas_src>

<mosaic_0001>
module attributes {stable_mosaic.version = 11 : i64} {
  func.func @_div_add_mul_kernel(%arg0: i32, %arg1: memref<128x16xf32, #tpu.memory_space<vmem>>, %arg2: memref<128x16xf32, #tpu.memory_space<vmem>>, %arg3: memref<16x16xf32, #tpu.memory_space<vmem>>, %arg4: memref<128x16xf32, #tpu.memory_space<vmem>>) attributes {dimension_semantics = [#tpu.dimension_semantics<parallel>], iteration_bounds = array<i64: 1>, scalar_prefetch = 0 : i64, scratch_operands = 0 : i64, tpu.core_type = #tpu.core_type<tc>, window_params = [{transform_indices = @transform_0, window_bounds = array<i64: 128, 16>}, {transform_indices = @transform_1, window_bounds = array<i64: 128, 16>}, {pipeline_mode = #tpu.pipeline_mode<synchronous>, transform_indices = @transform_2, window_bounds = array<i64: 16, 16>}, {transform_indices = @transform_3, window_bounds = array<i64: 128, 16>}]} {
    %c0 = arith.constant 0 : index
    %c0_0 = arith.constant 0 : index
    %0 = vector.load %arg2[%c0, %c0_0] : memref<128x16xf32, #tpu.memory_space<vmem>>, vector<128x16xf32>
    %cst = arith.constant 2.000000e+00 : f32
    %1 = vector.broadcast %cst : f32 to vector<128x16xf32>
    %2 = arith.mulf %0, %1 : vector<128x16xf32>
    %c0_1 = arith.constant 0 : index
    %c0_2 = arith.constant 0 : index
    %3 = vector.load %arg1[%c0_1, %c0_2] : memref<128x16xf32, #tpu.memory_space<vmem>>, vector<128x16xf32>
    %cst_3 = arith.constant 2.000000e+01 : f32
    %4 = vector.broadcast %cst_3 : f32 to vector<128x16xf32>
    %5 = arith.mulf %3, %4 : vector<128x16xf32>
    %6 = arith.addf %5, %2 : vector<128x16xf32>
    %c0_4 = arith.constant 0 : index
    %c0_5 = arith.constant 0 : index
    %7 = vector.load %arg3[%c0_4, %c0_5] : memref<16x16xf32, #tpu.memory_space<vmem>>, vector<16x16xf32>
    %cst_6 = arith.constant dense<0.000000e+00> : vector<128x16xf32>
    %8 = tpu.matmul %6, %7, %cst_6 {dimension_numbers = #tpu.dot_dimension_numbers<[1], [0], [0], [1], [0, 0, 1, 1], [], []>} : vector<128x16xf32>, vector<16x16xf32>, vector<128x16xf32> -> vector<128x16xf32>
    %cst_7 = arith.constant 2.000000e+01 : f32
    %9 = vector.broadcast %cst_7 : f32 to vector<128x16xf32>
    %10 = arith.mulf %8, %9 : vector<128x16xf32>
    %11 = arith.addf %10, %2 : vector<128x16xf32>
    %c0_8 = arith.constant 0 : index
    %c0_9 = arith.constant 0 : index
    %12 = vector.load %arg4[%c0_8, %c0_9] : memref<128x16xf32, #tpu.memory_space<vmem>>, vector<128x16xf32>
    tpu.vector_store %arg4[%c0_8, %c0_9], %11 {strides = array<i32>} : memref<128x16xf32, #tpu.memory_space<vmem>>, vector<128x16xf32>,
    return
  }
  func.func @transform_0(%arg0: i32) -> (i32, i32) {
    %c0_i32 = arith.constant 0 : i32
    %c0_i32_0 = arith.constant 0 : i32
    return %arg0, %c0_i32 : i32, i32
  }
  func.func @transform_1(%arg0: i32) -> (i32, i32) {
    %c0_i32 = arith.constant 0 : i32
    %c0_i32_0 = arith.constant 0 : i32
    return %arg0, %c0_i32 : i32, i32
  }
  func.func @transform_2(%arg0: i32) -> (i32, i32) {
    %c0_i32 = arith.constant 0 : i32
    %c0_i32_0 = arith.constant 0 : i32
    %c0_i32_1 = arith.constant 0 : i32
    return %c0_i32, %c0_i32_0 : i32, i32
  }
  func.func @transform_3(%arg0: i32) -> (i32, i32) {
    %c0_i32 = arith.constant 0 : i32
    %c0_i32_0 = arith.constant 0 : i32
    return %arg0, %c0_i32 : i32, i32
  }
}

</mosaic_0001>

<llo_original>
// kernel: div_add_mul.1
$region0: #{div_add_mul.1}
  #allocation0 [shape = 'u32[]', space=smem, size = 0x4, offset = 0x4, fixed_abs, tag = 'smem constant byte address 0x4 - core index']
  #allocation1 [shape = 'u32[144,128]{1,0:T(1,128)}', space=vmem, size = 0x12000, scoped, tag = 'internal scratch']
  %s0 = inlined_call_operand.hbm [shape: f32[128,16], index: 0, kind: input, shape index: {}]
  %s1 = inlined_call_operand.hbm [shape: f32[128,16], index: 1, kind: input, shape index: {}]
  %s2 = inlined_call_operand.hbm [shape: f32[16,16], index: 2, kind: input, shape index: {}]
  %s3 = inlined_call_operand.hbm [shape: f32[128,16], index: 3, kind: output, shape index: {}]
  %s4 = sld [smem:[#allocation0]]
  $region34: #{div_add_mul.1} parent=0
    _
  %s6 = ssub.s32 1, %s4
  %s7 = scalar_select 0, %s6, %s4
  $region1: #{div_add_mul.1} parent=0
    #allocation2 [shape = 'u8[65536]{0}', space=vmem, size = 0x10000, scoped, tag = 'input window, operand 0, single buffered']
    #allocation3 [shape = 's32[1]{0}', space=sflag, size = 0x4, scoped, tag = 'scoped memory for div_add_mul.1']
    #allocation4 [shape = 's32[1]{0}', space=sflag, size = 0x4, scoped, tag = 'scoped memory for div_add_mul.1']
    #allocation5 [shape = 'u8[65536]{0}', space=vmem, size = 0x10000, scoped, tag = 'input window, operand 1, single buffered']
    #allocation6 [shape = 's32[1]{0}', space=sflag, size = 0x4, scoped, tag = 'scoped memory for div_add_mul.1']
    #allocation7 [shape = 'u8[8192]{0}', space=vmem, size = 0x2000, scoped, tag = 'input window, operand 2, single buffered']
    #allocation8 [shape = 'u8[65536]{0}', space=vmem, size = 0x10000, scoped, tag = 'output window, operand 0, single buffered']
    %8 = vsyncpa [#allocation3], 0
    %9 = vsyncpa [#allocation6], 0
    %10 = vsyncpa [#allocation4], 0
    // Predicated region
    $region2: #{div_add_mul.1} parent=1 // pred_check
      _
    $region3: #{div_add_mul.1} parent=1 // pred_check_branch
      %12 = sbr.rel (0) target = $region5
    $region4: #{div_add_mul.1} parent=1 // pred_region
      %s14 = ssub.s32 2048, 2048
      %15 = vsyncadd [#allocation3], %s14
      %s16 = sshll.u32 [#allocation2], 4
      %s17 = int_to_ptr.vmem [resolvable:$true] %s16
      %22 = dma.hbm_to_vmem [thread:$0]  %s0, 2048, %s17, [#allocation3], 128, 128, 8
    $region5: #{div_add_mul.1} parent=1 // pred_fallthru
      _
    // Predicated region
    $region6: #{div_add_mul.1} parent=1 // pred_check
      _
    $region7: #{div_add_mul.1} parent=1 // pred_check_branch
      %24 = sbr.rel (0) target = $region9
    $region8: #{div_add_mul.1} parent=1 // pred_region
      %s26 = ssub.s32 2048, 2048
      %27 = vsyncadd [#allocation6], %s26
      %s28 = sshll.u32 [#allocation5], 4
      %s29 = int_to_ptr.vmem [resolvable:$true] %s28
      %34 = dma.hbm_to_vmem [thread:$0]  %s1, 2048, %s29, [#allocation6], 128, 128, 8
    $region9: #{div_add_mul.1} parent=1 // pred_fallthru
      _
    // Predicated region
    $region10: #{div_add_mul.1} parent=1 // pred_check
      _
    $region11: #{div_add_mul.1} parent=1 // pred_check_branch
      %36 = sbr.rel (0) target = $region13
    $region12: #{div_add_mul.1} parent=1 // pred_region
      %s38 = ssub.s32 256, 256
      %39 = vsyncadd [#allocation6], %s38
      %s40 = sshll.u32 [#allocation7], 4
      %s41 = int_to_ptr.vmem [resolvable:$true] %s40
      %46 = dma.hbm_to_vmem [thread:$0]  %s2, 256, %s41, [#allocation6], 128, 128, 8
    $region13: #{div_add_mul.1} parent=1 // pred_fallthru
      _
    // Predicated region
    $region14: #{div_add_mul.1} parent=1 // pred_check
      _
    $region15: #{div_add_mul.1} parent=1 // pred_check_branch
      %48 = sbr.rel (0) target = $region17
    $region16: #{div_add_mul.1} parent=1 // pred_region
      %49 = dma.done [#allocation3], 2048
    $region17: #{div_add_mul.1} parent=1 // pred_fallthru
      _
    // Predicated region
    $region18: #{div_add_mul.1} parent=1 // pred_check
      _
    $region19: #{div_add_mul.1} parent=1 // pred_check_branch
      %51 = sbr.rel (0) target = $region21
    $region20: #{div_add_mul.1} parent=1 // pred_region
      %52 = dma.done [#allocation6], 2048
    $region21: #{div_add_mul.1} parent=1 // pred_fallthru
      _
    // Predicated region
    $region22: #{div_add_mul.1} parent=1 // pred_check
      _
    $region23: #{div_add_mul.1} parent=1 // pred_check_branch
      %54 = sbr.rel (0) target = $region25
    $region24: #{div_add_mul.1} parent=1 // pred_region
      %55 = dma.done [#allocation6], 256
    $region25: #{div_add_mul.1} parent=1 // pred_fallthru
      _
    %v56 = vld [vmem:[#allocation5] sm:$0xff]
    %v57 = vld [vmem:[#allocation5 + $0x8] sm:$0xff]
    %v58 = vld [vmem:[#allocation5 + $0x10] sm:$0xff]
    %v59 = vld [vmem:[#allocation5 + $0x18] sm:$0xff]
    %v60 = vld [vmem:[#allocation5 + $0x20] sm:$0xff]
    %v61 = vld [vmem:[#allocation5 + $0x28] sm:$0xff]
    %v62 = vld [vmem:[#allocation5 + $0x30] sm:$0xff]
    %v63 = vld [vmem:[#allocation5 + $0x38] sm:$0xff]
    %v64 = vld [vmem:[#allocation5 + $0x40] sm:$0xff]
    %v65 = vld [vmem:[#allocation5 + $0x48] sm:$0xff]
    %v66 = vld [vmem:[#allocation5 + $0x50] sm:$0xff]
    %v67 = vld [vmem:[#allocation5 + $0x58] sm:$0xff]
    %v68 = vld [vmem:[#allocation5 + $0x60] sm:$0xff]
    %v69 = vld [vmem:[#allocation5 + $0x68] sm:$0xff]
    %v70 = vld [vmem:[#allocation5 + $0x70] sm:$0xff]
    %v71 = vld [vmem:[#allocation5 + $0x78] sm:$0xff]
    %v72 = vmul.f32 %v56, 2.0
    %v73 = vmul.f32 %v57, 2.0
    %v74 = vmul.f32 %v58, 2.0
    %v75 = vmul.f32 %v59, 2.0
    %v76 = vmul.f32 %v60, 2.0
    %v77 = vmul.f32 %v61, 2.0
    %v78 = vmul.f32 %v62, 2.0
    %v79 = vmul.f32 %v63, 2.0
    %v80 = vmul.f32 %v64, 2.0
    %v81 = vmul.f32 %v65, 2.0
    %v82 = vmul.f32 %v66, 2.0
    %v83 = vmul.f32 %v67, 2.0
    %v84 = vmul.f32 %v68, 2.0
    %v85 = vmul.f32 %v69, 2.0
    %v86 = vmul.f32 %v70, 2.0
    %v87 = vmul.f32 %v71, 2.0
    %v88 = vld [vmem:[#allocation2] sm:$0xff]
    %v89 = vld [vmem:[#allocation2 + $0x8] sm:$0xff]
    %v90 = vld [vmem:[#allocation2 + $0x10] sm:$0xff]
    %v91 = vld [vmem:[#allocation2 + $0x18] sm:$0xff]
    %v92 = vld [vmem:[#allocation2 + $0x20] sm:$0xff]
    %v93 = vld [vmem:[#allocation2 + $0x28] sm:$0xff]
    %v94 = vld [vmem:[#allocation2 + $0x30] sm:$0xff]
    %v95 = vld [vmem:[#allocation2 + $0x38] sm:$0xff]
    %v96 = vld [vmem:[#allocation2 + $0x40] sm:$0xff]
    %v97 = vld [vmem:[#allocation2 + $0x48] sm:$0xff]
    %v98 = vld [vmem:[#allocation2 + $0x50] sm:$0xff]
    %v99 = vld [vmem:[#allocation2 + $0x58] sm:$0xff]
    %v100 = vld [vmem:[#allocation2 + $0x60] sm:$0xff]
    %v101 = vld [vmem:[#allocation2 + $0x68] sm:$0xff]
    %v102 = vld [vmem:[#allocation2 + $0x70] sm:$0xff]
    %v103 = vld [vmem:[#allocation2 + $0x78] sm:$0xff]
    %v104 = vmul.f32 %v88, 20.0
    %v105 = vmul.f32 %v89, 20.0
    %v106 = vmul.f32 %v90, 20.0
    %v107 = vmul.f32 %v91, 20.0
    %v108 = vmul.f32 %v92, 20.0
    %v109 = vmul.f32 %v93, 20.0
    %v110 = vmul.f32 %v94, 20.0
    %v111 = vmul.f32 %v95, 20.0
    %v112 = vmul.f32 %v96, 20.0
    %v113 = vmul.f32 %v97, 20.0
    %v114 = vmul.f32 %v98, 20.0
    %v115 = vmul.f32 %v99, 20.0
    %v116 = vmul.f32 %v100, 20.0
    %v117 = vmul.f32 %v101, 20.0
    %v118 = vmul.f32 %v102, 20.0
    %v119 = vmul.f32 %v103, 20.0
    %v120 = vadd.f32 %v104, %v72
    %v121 = vadd.f32 %v105, %v73
    %v122 = vadd.f32 %v106, %v74
    %v123 = vadd.f32 %v107, %v75
    %v124 = vadd.f32 %v108, %v76
    %v125 = vadd.f32 %v109, %v77
    %v126 = vadd.f32 %v110, %v78
    %v127 = vadd.f32 %v111, %v79
    %v128 = vadd.f32 %v112, %v80
    %v129 = vadd.f32 %v113, %v81
    %v130 = vadd.f32 %v114, %v82
    %v131 = vadd.f32 %v115, %v83
    %v132 = vadd.f32 %v116, %v84
    %v133 = vadd.f32 %v117, %v85
    %v134 = vadd.f32 %v118, %v86
    %v135 = vadd.f32 %v119, %v87
    %v136 = vld [vmem:[#allocation7] sm:$0xff]
    %v137 = vld [vmem:[#allocation7 + $0x8] sm:$0xff]
    %vm138 = vcmask 130048
    %v140 = vsel %vm138, %v120, 0
    %v143 = vsel %vm138, %v121, 0
    %v146 = vsel %vm138, %v122, 0
    %v149 = vsel %vm138, %v123, 0
    %v152 = vsel %vm138, %v124, 0
    %v155 = vsel %vm138, %v125, 0
    %v158 = vsel %vm138, %v126, 0
    %v161 = vsel %vm138, %v127, 0
    %v164 = vsel %vm138, %v128, 0
    %v167 = vsel %vm138, %v129, 0
    %v170 = vsel %vm138, %v130, 0
    %v173 = vsel %vm138, %v131, 0
    %v176 = vsel %vm138, %v132, 0
    %v179 = vsel %vm138, %v133, 0
    %v182 = vsel %vm138, %v134, 0
    %v185 = vsel %vm138, %v135, 0
    %187 = vmatprep.subr.mxu0 0.0
    %188 = vmatpush1.msra.mxu0 0.0
    %189 = vmatprep.subr.mxu0 0.0
    %190 = vmatpush1.msra.mxu0 0.0
    %191 = vmatprep.subr.mxu0 0.0
    %192 = vmatpush1.msra.mxu0 0.0
    %193 = vmatprep.subr.mxu0 0.0
    %194 = vmatpush1.msra.mxu0 0.0
    %195 = vmatprep.subr.mxu0 0.0
    %196 = vmatpush1.msra.mxu0 0.0
    %197 = vmatprep.subr.mxu0 0.0
    %198 = vmatpush1.msra.mxu0 0.0
    %199 = vmatprep.subr.mxu0 0.0
    %200 = vmatpush1.msra.mxu0 0.0
    %201 = vmatprep.subr.mxu0 0.0
    %202 = vmatpush1.msra.mxu0 0.0
    %203 = vmatprep.subr.mxu0 0.0
    %204 = vmatpush1.msra.mxu0 0.0
    %205 = vmatprep.subr.mxu0 0.0
    %206 = vmatpush1.msra.mxu0 0.0
    %207 = vmatprep.subr.mxu0 0.0
    %208 = vmatpush1.msra.mxu0 0.0
    %209 = vmatprep.subr.mxu0 0.0
    %210 = vmatpush1.msra.mxu0 0.0
    %211 = vmatprep.subr.mxu0 0.0
    %212 = vmatpush1.msra.mxu0 0.0
    %213 = vmatprep.subr.mxu0 0.0
    %214 = vmatpush1.msra.mxu0 0.0
    %215 = vmatprep.subr.mxu0 0.0
    %216 = vmatpush1.msra.mxu0 %v137
    %217 = vmatprep.subr.mxu0 0.0
    %218 = vmatpush1.msra.mxu0 %v136
    %219 = vmatprep.subr.mxu0 0.0
    %220 = vmatpush2.msra.mxu0 0.0
    %221 = vmatprep.subr.mxu0 0.0
    %222 = vmatpush2.msra.mxu0 0.0
    %223 = vmatprep.subr.mxu0 0.0
    %224 = vmatpush2.msra.mxu0 0.0
    %225 = vmatprep.subr.mxu0 0.0
    %226 = vmatpush2.msra.mxu0 0.0
    %227 = vmatprep.subr.mxu0 0.0
    %228 = vmatpush2.msra.mxu0 0.0
    %229 = vmatprep.subr.mxu0 0.0
    %230 = vmatpush2.msra.mxu0 0.0
    %231 = vmatprep.subr.mxu0 0.0
    %232 = vmatpush2.msra.mxu0 0.0
    %233 = vmatprep.subr.mxu0 0.0
    %234 = vmatpush2.msra.mxu0 0.0
    %235 = vmatprep.subr.mxu0 0.0
    %236 = vmatpush2.msra.mxu0 0.0
    %237 = vmatprep.subr.mxu0 0.0
    %238 = vmatpush2.msra.mxu0 0.0
    %239 = vmatprep.subr.mxu0 0.0
    %240 = vmatpush2.msra.mxu0 0.0
    %241 = vmatprep.subr.mxu0 0.0
    %242 = vmatpush2.msra.mxu0 0.0
    %243 = vmatprep.subr.mxu0 0.0
    %244 = vmatpush2.msra.mxu0 0.0
    %245 = vmatprep.subr.mxu0 0.0
    %246 = vmatpush2.msra.mxu0 0.0
    %247 = vmatprep.subr.mxu0 0.0
    %248 = vmatpush2.msra.mxu0 0.0
    %249 = vmatprep.subr.mxu0 0.0
    %250 = vmatpush2.msra.mxu0 0.0
    %251 = vmatprep.mubr.f32.mxu0 0.0
    %252 = vmatmul.mubr.f32.gmra.mxu0 %v140
    %v253 = vpop.f32.mrf.mxu0
    %v254 = vadd.f32 0.0, %v253
    %v255 = vpop.f32.mrf.mxu0
    %256 = vmatprep.mubr.f32.mxu0 0.0
    %257 = vmatmul.mubr.f32.gmra.mxu0 %v143
    %v258 = vpop.f32.mrf.mxu0
    %v259 = vadd.f32 0.0, %v258
    %v260 = vpop.f32.mrf.mxu0
    %261 = vmatprep.mubr.f32.mxu0 0.0
    %262 = vmatmul.mubr.f32.gmra.mxu0 %v146
    %v263 = vpop.f32.mrf.mxu0
    %v264 = vadd.f32 0.0, %v263
    %v265 = vpop.f32.mrf.mxu0
    %266 = vmatprep.mubr.f32.mxu0 0.0
    %267 = vmatmul.mubr.f32.gmra.mxu0 %v149
    %v268 = vpop.f32.mrf.mxu0
    %v269 = vadd.f32 0.0, %v268
    %v270 = vpop.f32.mrf.mxu0
    %271 = vmatprep.mubr.f32.mxu0 0.0
    %272 = vmatmul.mubr.f32.gmra.mxu0 %v152
    %v273 = vpop.f32.mrf.mxu0
    %v274 = vadd.f32 0.0, %v273
    %v275 = vpop.f32.mrf.mxu0
    %276 = vmatprep.mubr.f32.mxu0 0.0
    %277 = vmatmul.mubr.f32.gmra.mxu0 %v155
    %v278 = vpop.f32.mrf.mxu0
    %v279 = vadd.f32 0.0, %v278
    %v280 = vpop.f32.mrf.mxu0
    %281 = vmatprep.mubr.f32.mxu0 0.0
    %282 = vmatmul.mubr.f32.gmra.mxu0 %v158
    %v283 = vpop.f32.mrf.mxu0
    %v284 = vadd.f32 0.0, %v283
    %v285 = vpop.f32.mrf.mxu0
    %286 = vmatprep.mubr.f32.mxu0 0.0
    %287 = vmatmul.mubr.f32.gmra.mxu0 %v161
    %v288 = vpop.f32.mrf.mxu0
    %v289 = vadd.f32 0.0, %v288
    %v290 = vpop.f32.mrf.mxu0
    %291 = vmatprep.mubr.f32.mxu0 0.0
    %292 = vmatmul.mubr.f32.gmra.mxu0 %v164
    %v293 = vpop.f32.mrf.mxu0
    %v294 = vadd.f32 0.0, %v293
    %v295 = vpop.f32.mrf.mxu0
    %296 = vmatprep.mubr.f32.mxu0 0.0
    %297 = vmatmul.mubr.f32.gmra.mxu0 %v167
    %v298 = vpop.f32.mrf.mxu0
    %v299 = vadd.f32 0.0, %v298
    %v300 = vpop.f32.mrf.mxu0
    %301 = vmatprep.mubr.f32.mxu0 0.0
    %302 = vmatmul.mubr.f32.gmra.mxu0 %v170
    %v303 = vpop.f32.mrf.mxu0
    %v304 = vadd.f32 0.0, %v303
    %v305 = vpop.f32.mrf.mxu0
    %306 = vmatprep.mubr.f32.mxu0 0.0
    %307 = vmatmul.mubr.f32.gmra.mxu0 %v173
    %v308 = vpop.f32.mrf.mxu0
    %v309 = vadd.f32 0.0, %v308
    %v310 = vpop.f32.mrf.mxu0
    %311 = vmatprep.mubr.f32.mxu0 0.0
    %312 = vmatmul.mubr.f32.gmra.mxu0 %v176
    %v313 = vpop.f32.mrf.mxu0
    %v314 = vadd.f32 0.0, %v313
    %v315 = vpop.f32.mrf.mxu0
    %316 = vmatprep.mubr.f32.mxu0 0.0
    %317 = vmatmul.mubr.f32.gmra.mxu0 %v179
    %v318 = vpop.f32.mrf.mxu0
    %v319 = vadd.f32 0.0, %v318
    %v320 = vpop.f32.mrf.mxu0
    %321 = vmatprep.mubr.f32.mxu0 0.0
    %322 = vmatmul.mubr.f32.gmra.mxu0 %v182
    %v323 = vpop.f32.mrf.mxu0
    %v324 = vadd.f32 0.0, %v323
    %v325 = vpop.f32.mrf.mxu0
    %326 = vmatprep.mubr.f32.mxu0 0.0
    %327 = vmatmul.mubr.f32.gmra.mxu0 %v185
    %v328 = vpop.f32.mrf.mxu0
    %v329 = vadd.f32 0.0, %v328
    %v330 = vpop.f32.mrf.mxu0
    %331 = vdwg.mxu0
    %v332 = vmul.f32 %v254, 20.0
    %v333 = vmul.f32 %v259, 20.0
    %v334 = vmul.f32 %v264, 20.0
    %v335 = vmul.f32 %v269, 20.0
    %v336 = vmul.f32 %v274, 20.0
    %v337 = vmul.f32 %v279, 20.0
    %v338 = vmul.f32 %v284, 20.0
    %v339 = vmul.f32 %v289, 20.0
    %v340 = vmul.f32 %v294, 20.0
    %v341 = vmul.f32 %v299, 20.0
    %v342 = vmul.f32 %v304, 20.0
    %v343 = vmul.f32 %v309, 20.0
    %v344 = vmul.f32 %v314, 20.0
    %v345 = vmul.f32 %v319, 20.0
    %v346 = vmul.f32 %v324, 20.0
    %v347 = vmul.f32 %v329, 20.0
    %v348 = vadd.f32 %v332, %v72
    %v349 = vadd.f32 %v333, %v73
    %v350 = vadd.f32 %v334, %v74
    %v351 = vadd.f32 %v335, %v75
    %v352 = vadd.f32 %v336, %v76
    %v353 = vadd.f32 %v337, %v77
    %v354 = vadd.f32 %v338, %v78
    %v355 = vadd.f32 %v339, %v79
    %v356 = vadd.f32 %v340, %v80
    %v357 = vadd.f32 %v341, %v81
    %v358 = vadd.f32 %v342, %v82
    %v359 = vadd.f32 %v343, %v83
    %v360 = vadd.f32 %v344, %v84
    %v361 = vadd.f32 %v345, %v85
    %v362 = vadd.f32 %v346, %v86
    %v363 = vadd.f32 %v347, %v87
    %364 = vst.msk [vmem:[#allocation8] sm:$0xff] %vm138, %v348
    %365 = vst.msk [vmem:[#allocation8 + $0x8] sm:$0xff] %vm138, %v349
    %366 = vst.msk [vmem:[#allocation8 + $0x10] sm:$0xff] %vm138, %v350
    %367 = vst.msk [vmem:[#allocation8 + $0x18] sm:$0xff] %vm138, %v351
    %368 = vst.msk [vmem:[#allocation8 + $0x20] sm:$0xff] %vm138, %v352
    %369 = vst.msk [vmem:[#allocation8 + $0x28] sm:$0xff] %vm138, %v353
    %370 = vst.msk [vmem:[#allocation8 + $0x30] sm:$0xff] %vm138, %v354
    %371 = vst.msk [vmem:[#allocation8 + $0x38] sm:$0xff] %vm138, %v355
    %372 = vst.msk [vmem:[#allocation8 + $0x40] sm:$0xff] %vm138, %v356
    %373 = vst.msk [vmem:[#allocation8 + $0x48] sm:$0xff] %vm138, %v357
    %374 = vst.msk [vmem:[#allocation8 + $0x50] sm:$0xff] %vm138, %v358
    %375 = vst.msk [vmem:[#allocation8 + $0x58] sm:$0xff] %vm138, %v359
    %376 = vst.msk [vmem:[#allocation8 + $0x60] sm:$0xff] %vm138, %v360
    %377 = vst.msk [vmem:[#allocation8 + $0x68] sm:$0xff] %vm138, %v361
    %378 = vst.msk [vmem:[#allocation8 + $0x70] sm:$0xff] %vm138, %v362
    %379 = vst.msk [vmem:[#allocation8 + $0x78] sm:$0xff] %vm138, %v363
    // Predicated region
    $region26: #{div_add_mul.1} parent=1 // pred_check
      _
    $region27: #{div_add_mul.1} parent=1 // pred_check_branch
      %381 = sbr.rel (0) target = $region29
    $region28: #{div_add_mul.1} parent=1 // pred_region
      %s383 = ssub.s32 2048, 2048
      %384 = vsyncadd [#allocation4], %s383
      %s385 = sshll.u32 [#allocation8], 4
      %s386 = int_to_ptr.vmem [resolvable:$true] %s385
      %391 = dma.vmem_to_hbm [thread:$0]  %s386, 2048, %s3, [#allocation4], 128, 128, 8
    $region29: #{div_add_mul.1} parent=1 // pred_fallthru
      _
    // Predicated region
    $region30: #{div_add_mul.1} parent=1 // pred_check
      _
    $region31: #{div_add_mul.1} parent=1 // pred_check_branch
      %393 = sbr.rel (0) target = $region33
    $region32: #{div_add_mul.1} parent=1 // pred_region
      %394 = dma.done [#allocation4], 2048
    $region33: #{div_add_mul.1} parent=1 // pred_fallthru
      _
    %395 = vsyncpa [#allocation3], 1
    %396 = vsyncpa [#allocation6], 1
    %397 = vsyncpa [#allocation4], 1

</llo_original>
